<compile_context>
chip_gen: v5e
topology: v5e:2x2
jax: 0.10.0
libtpu: 0.0.40
codegen_flags: <defaults>
</compile_context>

<pallas_src>
import functools
import math

import jax
import jax.numpy as jnp
from jax.experimental import pallas as pl
from jax.experimental.pallas import tpu as pltpu


def _styled_conv_kernel(w_ref, d_ref, x_ref, noise_ref, out_ref, *, K, Wp, Q):
    """One (batch sample, Cout tile) grid step.

    w_ref:     (K*K, TCo, Cin)  bf16   conv_scale * weight, tap-major (batch-invariant)
    d_ref:     (TCo, 1)         f32    per-sample demodulation scale
    x_ref:     (Cin, L)         bf16   style-modulated, zero-padded sample (row stride Wp)
    noise_ref: (1, Q)           f32    noise_weight * noise, width-padded & flattened
    out_ref:   (TCo, Q)         bf16
    """
    acc = None
    for kh in range(K):
        for kw in range(K):
            t = kh * K + kw
            shift = kh * Wp + kw                                  # static lane offset of this tap
            x_t = x_ref[:, shift:shift + Q]                       # (Cin, Q) bf16, static slice
            p = jnp.dot(w_ref[t], x_t, preferred_element_type=jnp.float32)   # MXU, f32 accum
            acc = p if acc is None else acc + p
    # Demodulate (per-row scale), noise injection (broadcast over channels), LeakyReLU(0.2).
    out = acc * d_ref[...] + noise_ref[...]                       # all f32
    out_ref[...] = jnp.maximum(out, 0.2 * out).astype(out_ref.dtype)


def _vmem_limit_bytes():
    """7/8 of physical VMEM (56 MiB on v7x, 112 MiB on v5e/v6e); safe fallback otherwise."""
    try:
        return (int(pltpu.get_tpu_info().vmem_capacity_bytes) * 7) // 8
    except Exception:
        return 48 * 1024 * 1024


def styled_conv_forward(x, style, noise, w_conv, w_mod, b_mod, noise_weight,
                        demodulate=True, out_dtype=jnp.bfloat16):
    """Pallas implementation of StyledConv.forward(input, style, noise)."""
    B, Cin, H, W = x.shape
    Cout, _, K, _ = w_conv.shape
    assert K % 2 == 1, "same-padding conv expects odd kernel size"
    pad = K // 2
    Hp, Wp = H + 2 * pad, W + 2 * pad
    Q = H * Wp                                   # flattened output length (width-padded layout)
    L = Hp * Wp + 2 * pad                        # max input flat index needed + 1
    L = ((L + 127) // 128) * 128                 # round lane dim up to a multiple of 128

    # ---- tiny plain-JAX glue: style projection + demod scale (per-sample vectors only) --------
    mod_scale = 1.0 / math.sqrt(style.shape[1])          # EqualLinear scale (lr_mul = 1)
    conv_scale = 1.0 / math.sqrt(Cin * K * K)            # ModulatedConv2d fan-in scale

    s = (style @ (w_mod * mod_scale).T + b_mod).astype(jnp.float32)          # (B, Cin)
    w_scaled = (conv_scale * w_conv).astype(jnp.float32)                     # (Cout, Cin, K, K)

    if demodulate:
        # sum_{ci,kh,kw} (w_scaled * s)^2  ==  (s^2) @ (sum_{kh,kw} w_scaled^2)^T
        w_sq = jnp.sum(w_scaled * w_scaled, axis=(2, 3))                     # (Cout, Cin)
        demod = jax.lax.rsqrt((s * s) @ w_sq.T + 1e-8)                       # (B, Cout)
    else:
        demod = jnp.ones((B, Cout), jnp.float32)

    # Tap-major, batch-invariant bf16 weight: w_taps[kh*K+kw, co, ci] = conv_scale * w[co,ci,kh,kw]
    w_taps = jnp.transpose(w_scaled, (2, 3, 0, 1)).reshape(K * K, Cout, Cin).astype(jnp.bfloat16)

    # Style modulation on the activations (f32, before the bf16 cast), then zero-pad + flatten.
    x_mod = x.astype(jnp.float32) * s[:, :, None, None]                      # (B, Cin, H, W)
    xp = jnp.pad(x_mod, ((0, 0), (0, 0), (pad, pad), (pad, pad)))
    x_flat = xp.reshape(B, Cin, Hp * Wp)
    x_flat = jnp.pad(x_flat, ((0, 0), (0, 0), (0, L - Hp * Wp))).astype(jnp.bfloat16)

    # Noise: fold the scalar NoiseInjection weight in, pad width to Wp, flatten. Stays f32.
    nz = jnp.asarray(noise_weight, jnp.float32) * noise.astype(jnp.float32)  # (B, 1, H, W)
    nz = jnp.pad(nz, ((0, 0), (0, 0), (0, 0), (0, Wp - W))).reshape(B, 1, Q)

    d3 = demod.reshape(B, Cout, 1)                                           # (B, Cout, 1)

    # Cout tiling: 256 fills the v6e/v7x 256x256 MXU; fall back to 128, else whole Cout.
    if Cout % 256 == 0:
        t_co = 256
    elif Cout % 128 == 0:
        t_co = 128
    else:
        t_co = Cout
    n_co = Cout // t_co

    # Grid-order selection: keep the larger operand resident across the inner axis so Pallas
    # skips its re-DMA (block index unchanged between consecutive steps).
    w_total_bytes = K * K * Cout * Cin * 2          # shared bf16 weights
    x_total_bytes = B * Cin * L * 2                 # all padded bf16 samples
    x_resident = (B - 1) * w_total_bytes <= (n_co - 1) * x_total_bytes

    if x_resident:
        # grid = (B, n_co): x / noise constant over inner c axis -> fetched once per sample.
        grid = (B, n_co)
        w_spec = pl.BlockSpec((K * K, t_co, Cin), lambda b, c: (0, c, 0))
        d_spec = pl.BlockSpec((None, t_co, 1),    lambda b, c: (b, c, 0))
        x_spec = pl.BlockSpec((None, Cin, L),     lambda b, c: (b, 0, 0))
        n_spec = pl.BlockSpec((None, 1, Q),       lambda b, c: (b, 0, 0))
        o_spec = pl.BlockSpec((None, t_co, Q),    lambda b, c: (b, c, 0))
    else:
        # grid = (n_co, B): weight tile constant over inner b axis -> fetched once per Cout tile.
        grid = (n_co, B)
        w_spec = pl.BlockSpec((K * K, t_co, Cin), lambda c, b: (0, c, 0))
        d_spec = pl.BlockSpec((None, t_co, 1),    lambda c, b: (b, c, 0))
        x_spec = pl.BlockSpec((None, Cin, L),     lambda c, b: (b, 0, 0))
        n_spec = pl.BlockSpec((None, 1, Q),       lambda c, b: (b, 0, 0))
        o_spec = pl.BlockSpec((None, t_co, Q),    lambda c, b: (b, c, 0))

    kernel = functools.partial(_styled_conv_kernel, K=K, Wp=Wp, Q=Q)

    out_flat = pl.pallas_call(
        kernel,
        out_shape=jax.ShapeDtypeStruct((B, Cout, Q), out_dtype),
        grid=grid,
        in_specs=[w_spec, d_spec, x_spec, n_spec],
        out_specs=o_spec,
        compiler_params=pltpu.CompilerParams(
            dimension_semantics=("parallel", "parallel"),
            vmem_limit_bytes=_vmem_limit_bytes(),
        ),
    )(w_taps, d3, x_flat, nz)

    # Drop the 2*pad unused columns per output row (width-padded layout). XLA fuses this slice
    # into the consumer; keep the padded (H, Wp) contract if a downstream kernel can take it.
    out = out_flat.reshape(B, Cout, H, Wp)[:, :, :, :W]
    return out


def reference_forward(x, style, noise, w_conv, w_mod, b_mod, noise_weight,
                      demodulate=True):
    """Pure-JAX reference mirroring the PyTorch grouped-conv formulation."""
    B, Cin, H, W = x.shape
    Cout, _, K, _ = w_conv.shape
    pad = K // 2
    mod_scale = 1.0 / math.sqrt(style.shape[1])
    conv_scale = 1.0 / math.sqrt(Cin * K * K)

    s = style @ (w_mod * mod_scale).T + b_mod                       # (B, Cin)
    w = conv_scale * w_conv[None] * s[:, None, :, None, None]       # (B, Cout, Cin, K, K)
    if demodulate:
        demod = jax.lax.rsqrt(jnp.sum(w * w, axis=(2, 3, 4)) + 1e-8)
        w = w * demod[:, :, None, None, None]
    wg = w.reshape(B * Cout, Cin, K, K)
    xg = x.reshape(1, B * Cin, H, W)
    out = jax.lax.conv_general_dilated(
        xg, wg, (1, 1), [(pad, pad), (pad, pad)],
        dimension_numbers=("NCHW", "OIHW", "NCHW"),
        feature_group_count=B,
        precision=jax.lax.Precision.HIGHEST)
    out = out.reshape(B, Cout, H, W)
    out = out + noise_weight * noise
    return jnp.where(out >= 0, out, 0.2 * out)


if __name__ == "__main__":
    B, Cin, Cout, K, style_dim, H, W = 2, 4, 8, 3, 8, 16, 16

    key = jax.random.PRNGKey(0)
    k1, k2, k3, k4, k5 = jax.random.split(key, 5)

    x = jax.random.normal(k1, (B, Cin, H, W), jnp.float32)
    style = jax.random.normal(k2, (B, style_dim), jnp.float32)
    noise = jax.random.normal(k3, (B, 1, H, W), jnp.float32)   # explicit noise (deterministic)

    # Parameters (shapes per the module's __init__; deterministic synthetic values).
    w_conv = jax.random.normal(k4, (Cout, Cin, K, K), jnp.float32)   # ModulatedConv2d.weight
    w_mod = jax.random.normal(k5, (Cin, style_dim), jnp.float32)     # EqualLinear.weight
    b_mod = jnp.ones((Cin,), jnp.float32)                            # EqualLinear bias (init 1)
    # NoiseInjection.weight is zero-initialized in the module; use 0.1 so the noise path
    # is numerically exercised (formula is identical).
    noise_weight = 0.1

    fwd = jax.jit(functools.partial(styled_conv_forward, demodulate=True))
    out = fwd(x, style, noise, w_conv, w_mod, b_mod, noise_weight)
    out = jax.block_until_ready(out)

    ref = reference_forward(x, style, noise, w_conv, w_mod, b_mod, noise_weight)
    assert out.shape == (B, Cout, H, W)
    # bf16 MXU inputs + bf16 output store with f32 accumulation: ~1e-2-level agreement vs f32 ref.
    out_f32 = out.astype(jnp.float32)
    assert jnp.allclose(out_f32, ref, atol=6e-2, rtol=5e-2), (
        f"max abs diff {jnp.max(jnp.abs(out_f32 - ref))}")
    print("KERNEL_OK")
</pallas_src>

<mosaic_0001>
module attributes {stable_mosaic.version = 11 : i64} {
  func.func @_styled_conv_kernel(%arg0: i32, %arg1: i32, %arg2: memref<9x8x4xbf16, #tpu.memory_space<vmem>>, %arg3: memref<1x8x1xf32, #tpu.memory_space<vmem>>, %arg4: memref<1x4x384xbf16, #tpu.memory_space<vmem>>, %arg5: memref<1x1x288xf32, #tpu.memory_space<vmem>>, %arg6: memref<1x8x288xbf16, #tpu.memory_space<vmem>>) attributes {dimension_semantics = [#tpu.dimension_semantics<parallel>, #tpu.dimension_semantics<parallel>], iteration_bounds = array<i64: 1, 2>, scalar_prefetch = 0 : i64, scratch_operands = 0 : i64, tpu.core_type = #tpu.core_type<tc>, window_params = [{transform_indices = @transform_0, window_bounds = array<i64: 9, 8, 4>}, {transform_indices = @transform_1, window_bounds = array<i64: 1, 8, 1>}, {transform_indices = @transform_2, window_bounds = array<i64: 1, 4, 384>}, {transform_indices = @transform_3, window_bounds = array<i64: 1, 1, 288>}, {transform_indices = @transform_4, window_bounds = array<i64: 1, 8, 288>}]} {
    %c0 = arith.constant 0 : index
    %c0_0 = arith.constant 0 : index
    %c0_1 = arith.constant 0 : index
    %0 = vector.load %arg4[%c0, %c0_0, %c0_1] : memref<1x4x384xbf16, #tpu.memory_space<vmem>>, vector<1x4x288xbf16>
    %1 = vector.shape_cast %0 : vector<1x4x288xbf16> to vector<4x288xbf16>
    %c0_2 = arith.constant 0 : index
    %c0_3 = arith.constant 0 : index
    %c0_4 = arith.constant 0 : index
    %2 = vector.load %arg2[%c0_2, %c0_3, %c0_4] : memref<9x8x4xbf16, #tpu.memory_space<vmem>>, vector<1x8x4xbf16>
    %3 = vector.shape_cast %2 : vector<1x8x4xbf16> to vector<8x4xbf16>
    %cst = arith.constant dense<0.000000e+00> : vector<8x288xf32>
    %4 = tpu.matmul %3, %1, %cst {dimension_numbers = #tpu.dot_dimension_numbers<[1], [0], [0], [1], [0, 0, 1, 1], [], []>} : vector<8x4xbf16>, vector<4x288xbf16>, vector<8x288xf32> -> vector<8x288xf32>
    %c0_5 = arith.constant 0 : index
    %c0_6 = arith.constant 0 : index
    %c1 = arith.constant 1 : index
    %5 = vector.load %arg4[%c0_5, %c0_6, %c1] : memref<1x4x384xbf16, #tpu.memory_space<vmem>>, vector<1x4x288xbf16>
    %6 = vector.shape_cast %5 : vector<1x4x288xbf16> to vector<4x288xbf16>
    %c1_7 = arith.constant 1 : index
    %c0_8 = arith.constant 0 : index
    %c0_9 = arith.constant 0 : index
    %7 = vector.load %arg2[%c1_7, %c0_8, %c0_9] : memref<9x8x4xbf16, #tpu.memory_space<vmem>>, vector<1x8x4xbf16>
    %8 = vector.shape_cast %7 : vector<1x8x4xbf16> to vector<8x4xbf16>
    %cst_10 = arith.constant dense<0.000000e+00> : vector<8x288xf32>
    %9 = tpu.matmul %8, %6, %cst_10 {dimension_numbers = #tpu.dot_dimension_numbers<[1], [0], [0], [1], [0, 0, 1, 1], [], []>} : vector<8x4xbf16>, vector<4x288xbf16>, vector<8x288xf32> -> vector<8x288xf32>
    %10 = arith.addf %4, %9 : vector<8x288xf32>
    %c0_11 = arith.constant 0 : index
    %c0_12 = arith.constant 0 : index
    %c2 = arith.constant 2 : index
    %11 = vector.load %arg4[%c0_11, %c0_12, %c2] : memref<1x4x384xbf16, #tpu.memory_space<vmem>>, vector<1x4x288xbf16>
    %12 = vector.shape_cast %11 : vector<1x4x288xbf16> to vector<4x288xbf16>
    %c2_13 = arith.constant 2 : index
    %c0_14 = arith.constant 0 : index
    %c0_15 = arith.constant 0 : index
    %13 = vector.load %arg2[%c2_13, %c0_14, %c0_15] : memref<9x8x4xbf16, #tpu.memory_space<vmem>>, vector<1x8x4xbf16>
    %14 = vector.shape_cast %13 : vector<1x8x4xbf16> to vector<8x4xbf16>
    %cst_16 = arith.constant dense<0.000000e+00> : vector<8x288xf32>
    %15 = tpu.matmul %14, %12, %cst_16 {dimension_numbers = #tpu.dot_dimension_numbers<[1], [0], [0], [1], [0, 0, 1, 1], [], []>} : vector<8x4xbf16>, vector<4x288xbf16>, vector<8x288xf32> -> vector<8x288xf32>
    %16 = arith.addf %10, %15 : vector<8x288xf32>
    %c0_17 = arith.constant 0 : index
    %c0_18 = arith.constant 0 : index
    %c18 = arith.constant 18 : index
    %17 = vector.load %arg4[%c0_17, %c0_18, %c18] : memref<1x4x384xbf16, #tpu.memory_space<vmem>>, vector<1x4x288xbf16>
    %18 = vector.shape_cast %17 : vector<1x4x288xbf16> to vector<4x288xbf16>
    %c3 = arith.constant 3 : index
    %c0_19 = arith.constant 0 : index
    %c0_20 = arith.constant 0 : index
    %19 = vector.load %arg2[%c3, %c0_19, %c0_20] : memref<9x8x4xbf16, #tpu.memory_space<vmem>>, vector<1x8x4xbf16>
    %20 = vector.shape_cast %19 : vector<1x8x4xbf16> to vector<8x4xbf16>
    %cst_21 = arith.constant dense<0.000000e+00> : vector<8x288xf32>
    %21 = tpu.matmul %20, %18, %cst_21 {dimension_numbers = #tpu.dot_dimension_numbers<[1], [0], [0], [1], [0, 0, 1, 1], [], []>} : vector<8x4xbf16>, vector<4x288xbf16>, vector<8x288xf32> -> vector<8x288xf32>
    %22 = arith.addf %16, %21 : vector<8x288xf32>
    %c0_22 = arith.constant 0 : index
    %c0_23 = arith.constant 0 : index
    %c19 = arith.constant 19 : index
    %23 = vector.load %arg4[%c0_22, %c0_23, %c19] : memref<1x4x384xbf16, #tpu.memory_space<vmem>>, vector<1x4x288xbf16>
    %24 = vector.shape_cast %23 : vector<1x4x288xbf16> to vector<4x288xbf16>
    %c4 = arith.constant 4 : index
    %c0_24 = arith.constant 0 : index
    %c0_25 = arith.constant 0 : index
    %25 = vector.load %arg2[%c4, %c0_24, %c0_25] : memref<9x8x4xbf16, #tpu.memory_space<vmem>>, vector<1x8x4xbf16>
    %26 = vector.shape_cast %25 : vector<1x8x4xbf16> to vector<8x4xbf16>
    %cst_26 = arith.constant dense<0.000000e+00> : vector<8x288xf32>
    %27 = tpu.matmul %26, %24, %cst_26 {dimension_numbers = #tpu.dot_dimension_numbers<[1], [0], [0], [1], [0, 0, 1, 1], [], []>} : vector<8x4xbf16>, vector<4x288xbf16>, vector<8x288xf32> -> vector<8x288xf32>
    %28 = arith.addf %22, %27 : vector<8x288xf32>
    %c0_27 = arith.constant 0 : index
    %c0_28 = arith.constant 0 : index
    %c20 = arith.constant 20 : index
    %29 = vector.load %arg4[%c0_27, %c0_28, %c20] : memref<1x4x384xbf16, #tpu.memory_space<vmem>>, vector<1x4x288xbf16>
    %30 = vector.shape_cast %29 : vector<1x4x288xbf16> to vector<4x288xbf16>
    %c5 = arith.constant 5 : index
    %c0_29 = arith.constant 0 : index
    %c0_30 = arith.constant 0 : index
    %31 = vector.load %arg2[%c5, %c0_29, %c0_30] : memref<9x8x4xbf16, #tpu.memory_space<vmem>>, vector<1x8x4xbf16>
    %32 = vector.shape_cast %31 : vector<1x8x4xbf16> to vector<8x4xbf16>
    %cst_31 = arith.constant dense<0.000000e+00> : vector<8x288xf32>
    %33 = tpu.matmul %32, %30, %cst_31 {dimension_numbers = #tpu.dot_dimension_numbers<[1], [0], [0], [1], [0, 0, 1, 1], [], []>} : vector<8x4xbf16>, vector<4x288xbf16>, vector<8x288xf32> -> vector<8x288xf32>
    %34 = arith.addf %28, %33 : vector<8x288xf32>
    %c0_32 = arith.constant 0 : index
    %c0_33 = arith.constant 0 : index
    %c36 = arith.constant 36 : index
    %35 = vector.load %arg4[%c0_32, %c0_33, %c36] : memref<1x4x384xbf16, #tpu.memory_space<vmem>>, vector<1x4x288xbf16>
    %36 = vector.shape_cast %35 : vector<1x4x288xbf16> to vector<4x288xbf16>
    %c6 = arith.constant 6 : index
    %c0_34 = arith.constant 0 : index
    %c0_35 = arith.constant 0 : index
    %37 = vector.load %arg2[%c6, %c0_34, %c0_35] : memref<9x8x4xbf16, #tpu.memory_space<vmem>>, vector<1x8x4xbf16>
    %38 = vector.shape_cast %37 : vector<1x8x4xbf16> to vector<8x4xbf16>
    %cst_36 = arith.constant dense<0.000000e+00> : vector<8x288xf32>
    %39 = tpu.matmul %38, %36, %cst_36 {dimension_numbers = #tpu.dot_dimension_numbers<[1], [0], [0], [1], [0, 0, 1, 1], [], []>} : vector<8x4xbf16>, vector<4x288xbf16>, vector<8x288xf32> -> vector<8x288xf32>
    %40 = arith.addf %34, %39 : vector<8x288xf32>
    %c0_37 = arith.constant 0 : index
    %c0_38 = arith.constant 0 : index
    %c37 = arith.constant 37 : index
    %41 = vector.load %arg4[%c0_37, %c0_38, %c37] : memref<1x4x384xbf16, #tpu.memory_space<vmem>>, vector<1x4x288xbf16>
    %42 = vector.shape_cast %41 : vector<1x4x288xbf16> to vector<4x288xbf16>
    %c7 = arith.constant 7 : index
    %c0_39 = arith.constant 0 : index
    %c0_40 = arith.constant 0 : index
    %43 = vector.load %arg2[%c7, %c0_39, %c0_40] : memref<9x8x4xbf16, #tpu.memory_space<vmem>>, vector<1x8x4xbf16>
    %44 = vector.shape_cast %43 : vector<1x8x4xbf16> to vector<8x4xbf16>
    %cst_41 = arith.constant dense<0.000000e+00> : vector<8x288xf32>
    %45 = tpu.matmul %44, %42, %cst_41 {dimension_numbers = #tpu.dot_dimension_numbers<[1], [0], [0], [1], [0, 0, 1, 1], [], []>} : vector<8x4xbf16>, vector<4x288xbf16>, vector<8x288xf32> -> vector<8x288xf32>
    %46 = arith.addf %40, %45 : vector<8x288xf32>
    %c0_42 = arith.constant 0 : index
    %c0_43 = arith.constant 0 : index
    %c38 = arith.constant 38 : index
    %47 = vector.load %arg4[%c0_42, %c0_43, %c38] : memref<1x4x384xbf16, #tpu.memory_space<vmem>>, vector<1x4x288xbf16>
    %48 = vector.shape_cast %47 : vector<1x4x288xbf16> to vector<4x288xbf16>
    %c8 = arith.constant 8 : index
    %c0_44 = arith.constant 0 : index
    %c0_45 = arith.constant 0 : index
    %49 = vector.load %arg2[%c8, %c0_44, %c0_45] : memref<9x8x4xbf16, #tpu.memory_space<vmem>>, vector<1x8x4xbf16>
    %50 = vector.shape_cast %49 : vector<1x8x4xbf16> to vector<8x4xbf16>
    %cst_46 = arith.constant dense<0.000000e+00> : vector<8x288xf32>
    %51 = tpu.matmul %50, %48, %cst_46 {dimension_numbers = #tpu.dot_dimension_numbers<[1], [0], [0], [1], [0, 0, 1, 1], [], []>} : vector<8x4xbf16>, vector<4x288xbf16>, vector<8x288xf32> -> vector<8x288xf32>
    %52 = arith.addf %46, %51 : vector<8x288xf32>
    %c0_47 = arith.constant 0 : index
    %c0_48 = arith.constant 0 : index
    %c0_49 = arith.constant 0 : index
    %53 = vector.load %arg3[%c0_47, %c0_48, %c0_49] : memref<1x8x1xf32, #tpu.memory_space<vmem>>, vector<1x8x1xf32>
    %54 = vector.shape_cast %53 : vector<1x8x1xf32> to vector<8x1xf32>
    %55 = vector.broadcast %54 : vector<8x1xf32> to vector<8x288xf32>
    %56 = arith.mulf %52, %55 : vector<8x288xf32>
    %c0_50 = arith.constant 0 : index
    %c0_51 = arith.constant 0 : index
    %c0_52 = arith.constant 0 : index
    %57 = vector.load %arg5[%c0_50, %c0_51, %c0_52] : memref<1x1x288xf32, #tpu.memory_space<vmem>>, vector<1x1x288xf32>
    %58 = vector.shape_cast %57 : vector<1x1x288xf32> to vector<1x288xf32>
    %59 = vector.broadcast %58 : vector<1x288xf32> to vector<8x288xf32>
    %60 = arith.addf %56, %59 : vector<8x288xf32>
    %cst_53 = arith.constant 2.000000e-01 : f32
    %61 = vector.broadcast %cst_53 : f32 to vector<8x288xf32>
    %62 = arith.mulf %61, %60 : vector<8x288xf32>
    %63 = arith.maximumf %60, %62 : vector<8x288xf32>
    %64 = arith.truncf %63 : vector<8x288xf32> to vector<8x288xbf16>
    %c0_54 = arith.constant 0 : index
    %c0_55 = arith.constant 0 : index
    %c0_56 = arith.constant 0 : index
    %65 = vector.load %arg6[%c0_54, %c0_55, %c0_56] : memref<1x8x288xbf16, #tpu.memory_space<vmem>>, vector<1x8x288xbf16>
    %66 = vector.shape_cast %65 : vector<1x8x288xbf16> to vector<8x288xbf16>
    %67 = vector.shape_cast %64 : vector<8x288xbf16> to vector<1x8x288xbf16>
    tpu.vector_store %arg6[%c0_54, %c0_55, %c0_56], %67 {strides = array<i32>} : memref<1x8x288xbf16, #tpu.memory_space<vmem>>, vector<1x8x288xbf16>,
    return
  }
  func.func @transform_0(%arg0: i32, %arg1: i32) -> (i32, i32, i32) {
    %c0_i32 = arith.constant 0 : i32
    %c0_i32_0 = arith.constant 0 : i32
    %c0_i32_1 = arith.constant 0 : i32
    return %c0_i32, %arg0, %c0_i32_0 : i32, i32, i32
  }
  func.func @transform_1(%arg0: i32, %arg1: i32) -> (i32, i32, i32) {
    %c0_i32 = arith.constant 0 : i32
    %c0_i32_0 = arith.constant 0 : i32
    return %arg1, %arg0, %c0_i32 : i32, i32, i32
  }
  func.func @transform_2(%arg0: i32, %arg1: i32) -> (i32, i32, i32) {
    %c0_i32 = arith.constant 0 : i32
    %c0_i32_0 = arith.constant 0 : i32
    %c0_i32_1 = arith.constant 0 : i32
    return %arg1, %c0_i32, %c0_i32_0 : i32, i32, i32
  }
  func.func @transform_3(%arg0: i32, %arg1: i32) -> (i32, i32, i32) {
    %c0_i32 = arith.constant 0 : i32
    %c0_i32_0 = arith.constant 0 : i32
    %c0_i32_1 = arith.constant 0 : i32
    return %arg1, %c0_i32, %c0_i32_0 : i32, i32, i32
  }
  func.func @transform_4(%arg0: i32, %arg1: i32) -> (i32, i32, i32) {
    %c0_i32 = arith.constant 0 : i32
    %c0_i32_0 = arith.constant 0 : i32
    return %arg1, %arg0, %c0_i32 : i32, i32, i32
  }
}

</mosaic_0001>

<llo_original>
// kernel: styled_conv_forward.1
$region0: #{styled_conv_forward.1}
  #allocation0 [shape = 'u32[]', space=smem, size = 0x4, offset = 0x4, fixed_abs, tag = 'smem constant byte address 0x4 - core index']
  #allocation1 [shape = 'u32[72,128]{1,0:T(1,128)}', space=vmem, size = 0x9000, scoped, tag = 'internal scratch']
  %s0 = inlined_call_operand.vmem [shape: bf16[9,8,4], index: 0, kind: input, shape index: {}]
  %s1 = inlined_call_operand.vmem [shape: f32[2,8,1], index: 1, kind: input, shape index: {}]
  %s2 = inlined_call_operand.vmem [shape: bf16[2,4,384], index: 2, kind: input, shape index: {}]
  %s3 = inlined_call_operand.vmem [shape: f32[2,1,288], index: 3, kind: input, shape index: {}]
  %s4 = inlined_call_operand.vmem [shape: bf16[2,8,288], index: 4, kind: output, shape index: {}]
  %s5 = sld [smem:[#allocation0]]
  $region49: #{styled_conv_forward.1} parent=0
    _
  %s7 = ssub.s32 1, %s5
  %s8 = scalar_select 0, %s7, %s5
  loop: start=0, step=1, limit=4
  $region2: #{styled_conv_forward.1} parent=0 // loop_pre_header
    _
  $region3: #{styled_conv_forward.1} parent=0 // loop_header
    %s10 = sphi 0, %s14
    %p11 = scmp.ge.s32.totalorder %s10, 4
    %s17 = sphi 0, %s29
    %s18 = sphi 0, %s25
    %s19 = sphi 0, %s17
    %s20 = sphi 0, %s18
    %s21 = sphi 0, %s19
    %s22 = sphi 0, %s20
    %s32 = sphi 0, %s34
    %s35 = sphi 0, %s32
    %s36 = sphi 0, %s35
    %s52 = sphi 0, %s36
    %s60 = sphi 0, %s62
    %s63 = sphi 0, %s60
    %s64 = sphi 0, %s63
    %s80 = sphi 0, %s64
    %s86 = sphi 0, %s88
    %s89 = sphi 0, %s86
    %s90 = sphi 0, %s89
    %s106 = sphi 0, %s90
    %s112 = sphi 0, %s114
    %s115 = sphi 0, %s112
    %s116 = sphi 0, %s115
    %s132 = sphi 0, %s116
    %s140 = sphi 0, %s142
    %s143 = sphi 0, %s140
    %s144 = sphi 0, %s143
    %s160 = sphi 0, %s144
  $region4: #{styled_conv_forward.1} parent=0 // loop_header_branch
    %13 = sbr.rel (%p11) target = $region8
  $region5: #{styled_conv_forward.1} parent=0 // loop_body
    %s15 = ssub.s32 %s10, 1
    %s16 = ssub.s32 %s10, 2
    %s23 = sadd.s32 1, %s18
    %p24 = scmp.ge.s32.totalorder %s23, 2
    %s25 = scalar_select %p24, 0, %s23
    %s26 = sadd.s32 1, %s17
    %s27 = scalar_select %p24, %s26, %s17
    %p28 = scmp.ge.s32.totalorder %s27, 1
    %s29 = scalar_select %p28, 0, %s27
    %s30 = ssub.s32 %s17, %s29
    %p31 = scmp.eq.s32.totalorder %s30, 0
    %s33 = sadd.s32 %s32, 1
    %s34 = scalar_select %p31, %s32, %s33
    %p37 = pneg %p31
    %p38 = scmp.eq.s32.totalorder %s10, 1
    %p39 = por %p37, %p38
    %p40 = scmp.ne.s32.totalorder %s32, %s35
    %p41 = scmp.eq.s32.totalorder %s10, 0
    %p42 = por %p40, %p41
    %p43 = scmp.ne.s32.totalorder %s32, %s35
    %p44 = scmp.eq.s32.totalorder %s15, 1
    %p45 = por %p43, %p44
    %p46 = scmp.ne.s32.totalorder %s35, %s36
    %p47 = scmp.eq.s32.totalorder %s15, 0
    %p48 = por %p46, %p47
    %p49 = scmp.ne.s32.totalorder %s35, %s36
    %p50 = scmp.eq.s32.totalorder %s16, 1
    %p51 = por %p49, %p50
    %p53 = scmp.ne.s32.totalorder %s36, %s52
    %p54 = scmp.eq.s32.totalorder %s16, 0
    %p55 = por %p53, %p54
    %s56 = ssub.s32 %s18, %s25
    %s57 = ssub.s32 %s17, %s29
    %s58 = sor.u32 %s56, %s57
    %p59 = scmp.eq.s32.totalorder %s58, 0
    %s61 = sadd.s32 %s60, 1
    %s62 = scalar_select %p59, %s60, %s61
    %p65 = pneg %p59
    %p66 = scmp.eq.s32.totalorder %s10, 1
    %p67 = por %p65, %p66
    %p68 = scmp.ne.s32.totalorder %s60, %s63
    %p69 = scmp.eq.s32.totalorder %s10, 0
    %p70 = por %p68, %p69
    %p71 = scmp.ne.s32.totalorder %s60, %s63
    %p72 = scmp.eq.s32.totalorder %s15, 1
    %p73 = por %p71, %p72
    %p74 = scmp.ne.s32.totalorder %s63, %s64
    %p75 = scmp.eq.s32.totalorder %s15, 0
    %p76 = por %p74, %p75
    %p77 = scmp.ne.s32.totalorder %s63, %s64
    %p78 = scmp.eq.s32.totalorder %s16, 1
    %p79 = por %p77, %p78
    %p81 = scmp.ne.s32.totalorder %s64, %s80
    %p82 = scmp.eq.s32.totalorder %s16, 0
    %p83 = por %p81, %p82
    %s84 = ssub.s32 %s18, %s25
    %p85 = scmp.eq.s32.totalorder %s84, 0
    %s87 = sadd.s32 %s86, 1
    %s88 = scalar_select %p85, %s86, %s87
    %p91 = pneg %p85
    %p92 = scmp.eq.s32.totalorder %s10, 1
    %p93 = por %p91, %p92
    %p94 = scmp.ne.s32.totalorder %s86, %s89
    %p95 = scmp.eq.s32.totalorder %s10, 0
    %p96 = por %p94, %p95
    %p97 = scmp.ne.s32.totalorder %s86, %s89
    %p98 = scmp.eq.s32.totalorder %s15, 1
    %p99 = por %p97, %p98
    %p100 = scmp.ne.s32.totalorder %s89, %s90
    %p101 = scmp.eq.s32.totalorder %s15, 0
    %p102 = por %p100, %p101
    %p103 = scmp.ne.s32.totalorder %s89, %s90
    %p104 = scmp.eq.s32.totalorder %s16, 1
    %p105 = por %p103, %p104
    %p107 = scmp.ne.s32.totalorder %s90, %s106
    %p108 = scmp.eq.s32.totalorder %s16, 0
    %p109 = por %p107, %p108
    %s110 = ssub.s32 %s18, %s25
    %p111 = scmp.eq.s32.totalorder %s110, 0
    %s113 = sadd.s32 %s112, 1
    %s114 = scalar_select %p111, %s112, %s113
    %p117 = pneg %p111
    %p118 = scmp.eq.s32.totalorder %s10, 1
    %p119 = por %p117, %p118
    %p120 = scmp.ne.s32.totalorder %s112, %s115
    %p121 = scmp.eq.s32.totalorder %s10, 0
    %p122 = por %p120, %p121
    %p123 = scmp.ne.s32.totalorder %s112, %s115
    %p124 = scmp.eq.s32.totalorder %s15, 1
    %p125 = por %p123, %p124
    %p126 = scmp.ne.s32.totalorder %s115, %s116
    %p127 = scmp.eq.s32.totalorder %s15, 0
    %p128 = por %p126, %p127
    %p129 = scmp.ne.s32.totalorder %s115, %s116
    %p130 = scmp.eq.s32.totalorder %s16, 1
    %p131 = por %p129, %p130
    %p133 = scmp.ne.s32.totalorder %s116, %s132
    %p134 = scmp.eq.s32.totalorder %s16, 0
    %p135 = por %p133, %p134
    %s136 = ssub.s32 %s18, %s25
    %s137 = ssub.s32 %s17, %s29
    %s138 = sor.u32 %s136, %s137
    %p139 = scmp.eq.s32.totalorder %s138, 0
    %s141 = sadd.s32 %s140, 1
    %s142 = scalar_select %p139, %s140, %s141
    %p145 = pneg %p139
    %p146 = scmp.eq.s32.totalorder %s10, 1
    %p147 = por %p145, %p146
    %p148 = scmp.ne.s32.totalorder %s140, %s143
    %p149 = scmp.eq.s32.totalorder %s10, 0
    %p150 = por %p148, %p149
    %p151 = scmp.ne.s32.totalorder %s140, %s143
    %p152 = scmp.eq.s32.totalorder %s15, 1
    %p153 = por %p151, %p152
    %p154 = scmp.ne.s32.totalorder %s143, %s144
    %p155 = scmp.eq.s32.totalorder %s15, 0
    %p156 = por %p154, %p155
    %p157 = scmp.ne.s32.totalorder %s143, %s144
    %p158 = scmp.eq.s32.totalorder %s16, 1
    %p159 = por %p157, %p158
    %p161 = scmp.ne.s32.totalorder %s144, %s160
    %p162 = scmp.eq.s32.totalorder %s16, 0
    %p163 = por %p161, %p162
    %p164 = scmp.le.s32.totalorder 1, %s10
    %p165 = scmp.lt.s32.totalorder %s10, 3
    %p166 = pnand %p164, %p165
    %p167 = pneg %p166
    // Predicated region
    $region9: #{styled_conv_forward.1} parent=5 // pred_check
      _
    $region10: #{styled_conv_forward.1} parent=5 // pred_check_branch
      %169 = sbr.rel (%p166) target = $region12
    $region11: #{styled_conv_forward.1} parent=5 // pred_region
      %s170 = ssub.s32 %s10, 1
      // Predicated region
      $region13: #{styled_conv_forward.1} parent=11 // pred_check
        %p171 = pneg %p48
      $region14: #{styled_conv_forward.1} parent=11 // pred_check_branch
        %173 = sbr.rel (%p171) target = $region16
      $region15: #{styled_conv_forward.1} parent=11 // pred_region
        %p174 = scmp.lt.s32.totalorder %s19, 0
        %s175 = scalar_select %p174, %s19, 0
        %s176 = smul.addr %s175, 4
        %s177 = scalar_lea.vmem %s0, %s176
      $region16: #{styled_conv_forward.1} parent=11 // pred_fallthru
        _
    $region12: #{styled_conv_forward.1} parent=5 // pred_fallthru
      _
    %p178 = scmp.lt.s32.totalorder %s10, 2
    // Predicated region
    $region17: #{styled_conv_forward.1} parent=5 // pred_check
      %p179 = pneg %p178
    $region18: #{styled_conv_forward.1} parent=5 // pred_check_branch
      %181 = sbr.rel (%p179) target = $region20
    $region19: #{styled_conv_forward.1} parent=5 // pred_region
      // Predicated region
      $region21: #{styled_conv_forward.1} parent=19 // pred_check
        %p182 = pneg %p70
      $region22: #{styled_conv_forward.1} parent=19 // pred_check_branch
        %184 = sbr.rel (%p182) target = $region24
      $region23: #{styled_conv_forward.1} parent=19 // pred_region
        %p185 = scmp.lt.s32.totalorder %s18, 1
        %s186 = scalar_select %p185, %s18, 1
        %p187 = scmp.lt.s32.totalorder %s17, 0
        %s188 = scalar_select %p187, %s17, 0
        %s189 = sadd.s32 %s188, %s186
        %s190 = smul.addr %s189, 8
        %s191 = scalar_lea.vmem %s1, %s190
      $region24: #{styled_conv_forward.1} parent=19 // pred_fallthru
        _
      // Predicated region
      $region25: #{styled_conv_forward.1} parent=19 // pred_check
        %p192 = pneg %p96
      $region26: #{styled_conv_forward.1} parent=19 // pred_check_branch
        %194 = sbr.rel (%p192) target = $region28
      $region27: #{styled_conv_forward.1} parent=19 // pred_region
        %p195 = scmp.lt.s32.totalorder %s18, 1
        %s196 = scalar_select %p195, %s18, 1
        %s197 = smul.addr %s196, 3
        %s198 = smul.addr %s197, 2
        %s199 = scalar_lea.vmem %s2, %s198
      $region28: #{styled_conv_forward.1} parent=19 // pred_fallthru
        _
      // Predicated region
      $region29: #{styled_conv_forward.1} parent=19 // pred_check
        %p200 = pneg %p122
      $region30: #{styled_conv_forward.1} parent=19 // pred_check_branch
        %202 = sbr.rel (%p200) target = $region32
      $region31: #{styled_conv_forward.1} parent=19 // pred_region
        %p203 = scmp.lt.s32.totalorder %s18, 1
        %s204 = scalar_select %p203, %s18, 1
        %s205 = smul.addr %s204, 3
        %s206 = scalar_lea.vmem %s3, %s205
      $region32: #{styled_conv_forward.1} parent=19 // pred_fallthru
        _
    $region20: #{styled_conv_forward.1} parent=5 // pred_fallthru
      _
    %p207 = scmp.le.s32.totalorder 1, %s10
    %p208 = scmp.lt.s32.totalorder %s10, 3
    %p209 = pnand %p207, %p208
    %p210 = pneg %p209
    // Predicated region
    $region33: #{styled_conv_forward.1} parent=5 // pred_check
      _
    $region34: #{styled_conv_forward.1} parent=5 // pred_check_branch
      %212 = sbr.rel (%p209) target = $region36
    $region35: #{styled_conv_forward.1} parent=5 // pred_region
      %s213 = ssub.s32 %s10, 1
      %p214 = scmp.lt.s32.totalorder %s19, 0
      %s215 = scalar_select %p214, %s19, 0
      %s216 = smul.addr %s215, 4
      %s217 = scalar_lea.vmem %s0, %s216
      %p218 = pneg %p48
      %p219 = pneg %p45
      %p220 = scmp.lt.s32.totalorder %s20, 1
      %s221 = scalar_select %p220, %s20, 1
      %p222 = scmp.lt.s32.totalorder %s19, 0
      %s223 = scalar_select %p222, %s19, 0
      %s224 = sadd.s32 %s223, %s221
      %s225 = smul.addr %s224, 8
      %s226 = scalar_lea.vmem %s1, %s225
      %p227 = pneg %p76
      %p228 = pneg %p73
      %p229 = scmp.lt.s32.totalorder %s20, 1
      %s230 = scalar_select %p229, %s20, 1
      %s231 = smul.addr %s230, 3
      %s232 = smul.addr %s231, 2
      %s233 = scalar_lea.vmem %s2, %s232
      %p234 = pneg %p102
      %p235 = pneg %p99
      %p236 = scmp.lt.s32.totalorder %s20, 1
      %s237 = scalar_select %p236, %s20, 1
      %s238 = smul.addr %s237, 3
      %s239 = scalar_lea.vmem %s3, %s238
      %p240 = pneg %p128
      %p241 = pneg %p125
      %p242 = pneg %p156
      %p243 = pneg %p153
      %p244 = scmp.lt.s32.totalorder %s20, 1
      %s245 = scalar_select %p244, %s20, 1
      %p246 = scmp.lt.s32.totalorder %s19, 0
      %s247 = scalar_select %p246, %s19, 0
      %s248 = smul.addr %s247, 3
      %s249 = smul.addr %s245, 3
      %s250 = sadd.s32 %s248, %s249
      %s251 = smul.addr %s250, 4
      %s252 = scalar_lea.vmem %s4, %s251
      %p253 = scmp.lt.s32.totalorder %s19, 0
      %s254 = scalar_select %p253, %s19, 0
      %s255 = smul.addr %s254, 4
      %s256 = scalar_lea.vmem %s0, %s255
      %p257 = scmp.lt.s32.totalorder %s20, 1
      %s258 = scalar_select %p257, %s20, 1
      %p259 = scmp.lt.s32.totalorder %s19, 0
      %s260 = scalar_select %p259, %s19, 0
      %s261 = sadd.s32 %s260, %s258
      %s262 = smul.addr %s261, 8
      %s263 = scalar_lea.vmem %s1, %s262
      %p264 = scmp.lt.s32.totalorder %s20, 1
      %s265 = scalar_select %p264, %s20, 1
      %s266 = smul.addr %s265, 3
      %s267 = smul.addr %s266, 2
      %s268 = scalar_lea.vmem %s2, %s267
      %p269 = scmp.lt.s32.totalorder %s20, 1
      %s270 = scalar_select %p269, %s20, 1
      %s271 = smul.addr %s270, 3
      %s272 = scalar_lea.vmem %s3, %s271
      %p273 = scmp.lt.s32.totalorder %s20, 1
      %s274 = scalar_select %p273, %s20, 1
      %p275 = scmp.lt.s32.totalorder %s19, 0
      %s276 = scalar_select %p275, %s19, 0
      %s277 = smul.addr %s276, 3
      %s278 = smul.addr %s274, 3
      %s279 = sadd.s32 %s277, %s278
      %s280 = smul.addr %s279, 4
      %s281 = scalar_lea.vmem %s4, %s280
      %v283 = vld [vmem:[%s268] sm:$0x3f]
      %v284 = vld [vmem:[%s256] sm:$0xf]
      %s285 = scalar_lea.vmem %s256, 4
      %v286 = vld [vmem:[%s285] sm:$0xf]
      %288 = vst [vmem:[#allocation1] ss:$4 sm:$0xff] %v283
      %v289 = vld.sshfl [vmem:[#allocation1] sm:$0xff pattern:$0x73625140]
      %v291 = vld.sshfl [vmem:[#allocation1 + $0x8] sm:$0xff pattern:$0x73625140]
      %v293 = vld.sshfl [vmem:[#allocation1 + $0x10] sm:$0xff pattern:$0x73625140]
      %295 = vrot.lane.b32.xlu0 %v289, 127
      %v296 = vpop.permute.xlu0 %295
      %297 = vrot.lane.b32.xlu0 %v291, 127
      %v298 = vpop.permute.xlu0 %297
      %299 = vrot.lane.b32.xlu0 %v293, 127
      %v300 = vpop.permute.xlu0 %299
      %vm301 = vcmask 1039360
      %v302 = vsel %vm301, %v296, %v298
      %v303 = vsel %vm301, %v298, %v300
      %vm304 = vcmask 31744
      %v306 = vsel %vm304, %v286, 0
      %vm308 = vcmask 1041408
      %v310 = vsel %vm308, %v302, 0
      %v313 = vsel %vm308, %v303, 0
      %v316 = vsel %vm308, %v300, 0
      %318 = vmatpush.bf16.msra.mxu0 0
      %319 = vmatpush.bf16.msra.mxu0 0
      %320 = vmatpush.bf16.msra.mxu0 0
      %321 = vmatpush.bf16.msra.mxu0 0
      %322 = vmatpush.bf16.msra.mxu0 0
      %323 = vmatpush.bf16.msra.mxu0 0
      %324 = vmatpush.bf16.msra.mxu0 0
      %325 = vmatpush.bf16.msra.mxu0 %v310
      %326 = vmatmul.bf16.gmra.mxu0 %v306
      %v327 = vpop.f32.mrf.mxu0
      %v328 = vadd.f32 0.0, %v327
      %v329 = vpop.f32.mrf.mxu0
      %330 = vdwg.mxu0
      %331 = vmatpush.bf16.msra.mxu0 0
      %332 = vmatpush.bf16.msra.mxu0 0
      %333 = vmatpush.bf16.msra.mxu0 0
      %334 = vmatpush.bf16.msra.mxu0 0
      %335 = vmatpush.bf16.msra.mxu0 0
      %336 = vmatpush.bf16.msra.mxu0 0
      %337 = vmatpush.bf16.msra.mxu0 0
      %338 = vmatpush.bf16.msra.mxu0 %v313
      %339 = vmatmul.bf16.gmra.mxu0 %v306
      %v340 = vpop.f32.mrf.mxu0
      %v341 = vadd.f32 0.0, %v340
      %v342 = vpop.f32.mrf.mxu0
      %343 = vdwg.mxu0
      %344 = vmatpush.bf16.msra.mxu0 0
      %345 = vmatpush.bf16.msra.mxu0 0
      %346 = vmatpush.bf16.msra.mxu0 0
      %347 = vmatpush.bf16.msra.mxu0 0
      %348 = vmatpush.bf16.msra.mxu0 0
      %349 = vmatpush.bf16.msra.mxu0 0
      %350 = vmatpush.bf16.msra.mxu0 0
      %351 = vmatpush.bf16.msra.mxu0 %v316
      %352 = vmatmul.bf16.gmra.mxu0 %v306
      %v353 = vpop.f32.mrf.mxu0
      %v354 = vadd.f32 0.0, %v353
      %v355 = vpop.f32.mrf.mxu0
      %356 = vdwg.mxu0
      %357 = vst [vmem:[#allocation1] ss:$4 sm:$0xff] %v283
      %v358 = vld.sshfl [vmem:[#allocation1] sm:$0xff pattern:$0x73625140]
      %v359 = vld.sshfl [vmem:[#allocation1 + $0x8] sm:$0xff pattern:$0x73625140]
      %v360 = vld.sshfl [vmem:[#allocation1 + $0x10] sm:$0xff pattern:$0x73625140]
      %v362 = vsel %vm304, %v284, 0
      %v364 = vsel %vm308, %v358, 0
      %v366 = vsel %vm308, %v359, 0
      %v368 = vsel %vm308, %v360, 0
      %370 = vmatpush.bf16.msra.mxu0 0
      %371 = vmatpush.bf16.msra.mxu0 0
      %372 = vmatpush.bf16.msra.mxu0 0
      %373 = vmatpush.bf16.msra.mxu0 0
      %374 = vmatpush.bf16.msra.mxu0 0
      %375 = vmatpush.bf16.msra.mxu0 0
      %376 = vmatpush.bf16.msra.mxu0 0
      %377 = vmatpush.bf16.msra.mxu0 %v364
      %378 = vmatmul.bf16.gmra.mxu0 %v362
      %v379 = vpop.f32.mrf.mxu0
      %v380 = vadd.f32 %v328, %v379
      %v381 = vpop.f32.mrf.mxu0
      %382 = vdwg.mxu0
      %383 = vmatpush.bf16.msra.mxu0 0
      %384 = vmatpush.bf16.msra.mxu0 0
      %385 = vmatpush.bf16.msra.mxu0 0
      %386 = vmatpush.bf16.msra.mxu0 0
      %387 = vmatpush.bf16.msra.mxu0 0
      %388 = vmatpush.bf16.msra.mxu0 0
      %389 = vmatpush.bf16.msra.mxu0 0
      %390 = vmatpush.bf16.msra.mxu0 %v366
      %391 = vmatmul.bf16.gmra.mxu0 %v362
      %v392 = vpop.f32.mrf.mxu0
      %v393 = vadd.f32 %v341, %v392
      %v394 = vpop.f32.mrf.mxu0
      %395 = vdwg.mxu0
      %396 = vmatpush.bf16.msra.mxu0 0
      %397 = vmatpush.bf16.msra.mxu0 0
      %398 = vmatpush.bf16.msra.mxu0 0
      %399 = vmatpush.bf16.msra.mxu0 0
      %400 = vmatpush.bf16.msra.mxu0 0
      %401 = vmatpush.bf16.msra.mxu0 0
      %402 = vmatpush.bf16.msra.mxu0 0
      %403 = vmatpush.bf16.msra.mxu0 %v368
      %404 = vmatmul.bf16.gmra.mxu0 %v362
      %v405 = vpop.f32.mrf.mxu0
      %v406 = vadd.f32 %v354, %v405
      %v407 = vpop.f32.mrf.mxu0
      %408 = vdwg.mxu0
      %v409 = vld [vmem:[%s268] sm:$0x3f]
      %s410 = scalar_lea.vmem %s256, 8
      %v411 = vld [vmem:[%s410] sm:$0xf]
      %413 = vst [vmem:[#allocation1] ss:$4 sm:$0xff] %v409
      %v414 = vld.sshfl [vmem:[#allocation1] sm:$0xff pattern:$0x73625140]
      %v416 = vld.sshfl [vmem:[#allocation1 + $0x8] sm:$0xff pattern:$0x73625140]
      %v418 = vld.sshfl [vmem:[#allocation1 + $0x10] sm:$0xff pattern:$0x73625140]
      %420 = vrot.lane.b32.xlu0 %v414, 126
      %v421 = vpop.permute.xlu0 %420
      %422 = vrot.lane.b32.xlu0 %v416, 126
      %v423 = vpop.permute.xlu0 %422
      %424 = vrot.lane.b32.xlu0 %v418, 126
      %v425 = vpop.permute.xlu0 %424
      %vm426 = vcmask 1031168
      %v427 = vsel %vm426, %v421, %v423
      %v428 = vsel %vm426, %v423, %v425
      %v430 = vsel %vm304, %v411, 0
      %v433 = vsel %vm308, %v427, 0
      %v436 = vsel %vm308, %v428, 0
      %v439 = vsel %vm308, %v425, 0
      %441 = vmatpush.bf16.msra.mxu0 0
      %442 = vmatpush.bf16.msra.mxu0 0
      %443 = vmatpush.bf16.msra.mxu0 0
      %444 = vmatpush.bf16.msra.mxu0 0
      %445 = vmatpush.bf16.msra.mxu0 0
      %446 = vmatpush.bf16.msra.mxu0 0
      %447 = vmatpush.bf16.msra.mxu0 0
      %448 = vmatpush.bf16.msra.mxu0 %v433
      %449 = vmatmul.bf16.gmra.mxu0 %v430
      %v450 = vpop.f32.mrf.mxu0
      %v451 = vadd.f32 0.0, %v450
      %v452 = vpop.f32.mrf.mxu0
      %453 = vdwg.mxu0
      %454 = vmatpush.bf16.msra.mxu0 0
      %455 = vmatpush.bf16.msra.mxu0 0
      %456 = vmatpush.bf16.msra.mxu0 0
      %457 = vmatpush.bf16.msra.mxu0 0
      %458 = vmatpush.bf16.msra.mxu0 0
      %459 = vmatpush.bf16.msra.mxu0 0
      %460 = vmatpush.bf16.msra.mxu0 0
      %461 = vmatpush.bf16.msra.mxu0 %v436
      %462 = vmatmul.bf16.gmra.mxu0 %v430
      %v463 = vpop.f32.mrf.mxu0
      %v464 = vadd.f32 0.0, %v463
      %v465 = vpop.f32.mrf.mxu0
      %466 = vdwg.mxu0
      %467 = vmatpush.bf16.msra.mxu0 0
      %468 = vmatpush.bf16.msra.mxu0 0
      %469 = vmatpush.bf16.msra.mxu0 0
      %470 = vmatpush.bf16.msra.mxu0 0
      %471 = vmatpush.bf16.msra.mxu0 0
      %472 = vmatpush.bf16.msra.mxu0 0
      %473 = vmatpush.bf16.msra.mxu0 0
      %474 = vmatpush.bf16.msra.mxu0 %v439
      %475 = vmatmul.bf16.gmra.mxu0 %v430
      %v476 = vpop.f32.mrf.mxu0
      %v477 = vadd.f32 0.0, %v476
      %v478 = vpop.f32.mrf.mxu0
      %479 = vdwg.mxu0
      %v480 = vadd.f32 %v380, %v451
      %v481 = vadd.f32 %v393, %v464
      %v482 = vadd.f32 %v406, %v477
      %v483 = vld [vmem:[%s268] sm:$0x3f]
      %s484 = scalar_lea.vmem %s256, 12
      %v485 = vld [vmem:[%s484] sm:$0xf]
      %487 = vst [vmem:[#allocation1] ss:$4 sm:$0xff] %v483
      %v488 = vld.sshfl [vmem:[#allocation1] sm:$0xff pattern:$0x73625140]
      %v490 = vld.sshfl [vmem:[#allocation1 + $0x8] sm:$0xff pattern:$0x73625140]
      %v492 = vld.sshfl [vmem:[#allocation1 + $0x10] sm:$0xff pattern:$0x73625140]
      %494 = vrot.lane.b32.xlu0 %v488, 110
      %v495 = vpop.permute.xlu0 %494
      %496 = vrot.lane.b32.xlu0 %v490, 110
      %v497 = vpop.permute.xlu0 %496
      %498 = vrot.lane.b32.xlu0 %v492, 110
      %v499 = vpop.permute.xlu0 %498
      %vm500 = vcmask 900096
      %v501 = vsel %vm500, %v495, %v497
      %v502 = vsel %vm500, %v497, %v499
      %v504 = vsel %vm304, %v485, 0
      %v507 = vsel %vm308, %v501, 0
      %v510 = vsel %vm308, %v502, 0
      %v513 = vsel %vm308, %v499, 0
      %515 = vmatpush.bf16.msra.mxu0 0
      %516 = vmatpush.bf16.msra.mxu0 0
      %517 = vmatpush.bf16.msra.mxu0 0
      %518 = vmatpush.bf16.msra.mxu0 0
      %519 = vmatpush.bf16.msra.mxu0 0
      %520 = vmatpush.bf16.msra.mxu0 0
      %521 = vmatpush.bf16.msra.mxu0 0
      %522 = vmatpush.bf16.msra.mxu0 %v507
      %523 = vmatmul.bf16.gmra.mxu0 %v504
      %v524 = vpop.f32.mrf.mxu0
      %v525 = vadd.f32 0.0, %v524
      %v526 = vpop.f32.mrf.mxu0
      %527 = vdwg.mxu0
      %528 = vmatpush.bf16.msra.mxu0 0
      %529 = vmatpush.bf16.msra.mxu0 0
      %530 = vmatpush.bf16.msra.mxu0 0
      %531 = vmatpush.bf16.msra.mxu0 0
      %532 = vmatpush.bf16.msra.mxu0 0
      %533 = vmatpush.bf16.msra.mxu0 0
      %534 = vmatpush.bf16.msra.mxu0 0
      %535 = vmatpush.bf16.msra.mxu0 %v510
      %536 = vmatmul.bf16.gmra.mxu0 %v504
      %v537 = vpop.f32.mrf.mxu0
      %v538 = vadd.f32 0.0, %v537
      %v539 = vpop.f32.mrf.mxu0
      %540 = vdwg.mxu0
      %541 = vmatpush.bf16.msra.mxu0 0
      %542 = vmatpush.bf16.msra.mxu0 0
      %543 = vmatpush.bf16.msra.mxu0 0
      %544 = vmatpush.bf16.msra.mxu0 0
      %545 = vmatpush.bf16.msra.mxu0 0
      %546 = vmatpush.bf16.msra.mxu0 0
      %547 = vmatpush.bf16.msra.mxu0 0
      %548 = vmatpush.bf16.msra.mxu0 %v513
      %549 = vmatmul.bf16.gmra.mxu0 %v504
      %v550 = vpop.f32.mrf.mxu0
      %v551 = vadd.f32 0.0, %v550
      %v552 = vpop.f32.mrf.mxu0
      %553 = vdwg.mxu0
      %v554 = vadd.f32 %v480, %v525
      %v555 = vadd.f32 %v481, %v538
      %v556 = vadd.f32 %v482, %v551
      %v557 = vld [vmem:[%s268] sm:$0x3f]
      %s558 = scalar_lea.vmem %s256, 16
      %v559 = vld [vmem:[%s558] sm:$0xf]
      %561 = vst [vmem:[#allocation1] ss:$4 sm:$0xff] %v557
      %v562 = vld.sshfl [vmem:[#allocation1] sm:$0xff pattern:$0x73625140]
      %v564 = vld.sshfl [vmem:[#allocation1 + $0x8] sm:$0xff pattern:$0x73625140]
      %v566 = vld.sshfl [vmem:[#allocation1 + $0x10] sm:$0xff pattern:$0x73625140]
      %568 = vrot.lane.b32.xlu0 %v562, 109
      %v569 = vpop.permute.xlu0 %568
      %570 = vrot.lane.b32.xlu0 %v564, 109
      %v571 = vpop.permute.xlu0 %570
      %572 = vrot.lane.b32.xlu0 %v566, 109
      %v573 = vpop.permute.xlu0 %572
      %vm574 = vcmask 891904
      %v575 = vsel %vm574, %v569, %v571
      %v576 = vsel %vm574, %v571, %v573
      %v578 = vsel %vm304, %v559, 0
      %v581 = vsel %vm308, %v575, 0
      %v584 = vsel %vm308, %v576, 0
      %v587 = vsel %vm308, %v573, 0
      %589 = vmatpush.bf16.msra.mxu0 0
      %590 = vmatpush.bf16.msra.mxu0 0
      %591 = vmatpush.bf16.msra.mxu0 0
      %592 = vmatpush.bf16.msra.mxu0 0
      %593 = vmatpush.bf16.msra.mxu0 0
      %594 = vmatpush.bf16.msra.mxu0 0
      %595 = vmatpush.bf16.msra.mxu0 0
      %596 = vmatpush.bf16.msra.mxu0 %v581
      %597 = vmatmul.bf16.gmra.mxu0 %v578
      %v598 = vpop.f32.mrf.mxu0
      %v599 = vadd.f32 0.0, %v598
      %v600 = vpop.f32.mrf.mxu0
      %601 = vdwg.mxu0
      %602 = vmatpush.bf16.msra.mxu0 0
      %603 = vmatpush.bf16.msra.mxu0 0
      %604 = vmatpush.bf16.msra.mxu0 0
      %605 = vmatpush.bf16.msra.mxu0 0
      %606 = vmatpush.bf16.msra.mxu0 0
      %607 = vmatpush.bf16.msra.mxu0 0
      %608 = vmatpush.bf16.msra.mxu0 0
      %609 = vmatpush.bf16.msra.mxu0 %v584
      %610 = vmatmul.bf16.gmra.mxu0 %v578
      %v611 = vpop.f32.mrf.mxu0
      %v612 = vadd.f32 0.0, %v611
      %v613 = vpop.f32.mrf.mxu0
      %614 = vdwg.mxu0
      %615 = vmatpush.bf16.msra.mxu0 0
      %616 = vmatpush.bf16.msra.mxu0 0
      %617 = vmatpush.bf16.msra.mxu0 0
      %618 = vmatpush.bf16.msra.mxu0 0
      %619 = vmatpush.bf16.msra.mxu0 0
      %620 = vmatpush.bf16.msra.mxu0 0
      %621 = vmatpush.bf16.msra.mxu0 0
      %622 = vmatpush.bf16.msra.mxu0 %v587
      %623 = vmatmul.bf16.gmra.mxu0 %v578
      %v624 = vpop.f32.mrf.mxu0
      %v625 = vadd.f32 0.0, %v624
      %v626 = vpop.f32.mrf.mxu0
      %627 = vdwg.mxu0
      %v628 = vadd.f32 %v554, %v599
      %v629 = vadd.f32 %v555, %v612
      %v630 = vadd.f32 %v556, %v625
      %v631 = vld [vmem:[%s268] sm:$0x3f]
      %s632 = scalar_lea.vmem %s256, 20
      %v633 = vld [vmem:[%s632] sm:$0xf]
      %635 = vst [vmem:[#allocation1] ss:$4 sm:$0xff] %v631
      %v636 = vld.sshfl [vmem:[#allocation1] sm:$0xff pattern:$0x73625140]
      %v638 = vld.sshfl [vmem:[#allocation1 + $0x8] sm:$0xff pattern:$0x73625140]
      %v640 = vld.sshfl [vmem:[#allocation1 + $0x10] sm:$0xff pattern:$0x73625140]
      %642 = vrot.lane.b32.xlu0 %v636, 108
      %v643 = vpop.permute.xlu0 %642
      %644 = vrot.lane.b32.xlu0 %v638, 108
      %v645 = vpop.permute.xlu0 %644
      %646 = vrot.lane.b32.xlu0 %v640, 108
      %v647 = vpop.permute.xlu0 %646
      %vm648 = vcmask 883712
      %v649 = vsel %vm648, %v643, %v645
      %v650 = vsel %vm648, %v645, %v647
      %v652 = vsel %vm304, %v633, 0
      %v655 = vsel %vm308, %v649, 0
      %v658 = vsel %vm308, %v650, 0
      %v661 = vsel %vm308, %v647, 0
      %663 = vmatpush.bf16.msra.mxu0 0
      %664 = vmatpush.bf16.msra.mxu0 0
      %665 = vmatpush.bf16.msra.mxu0 0
      %666 = vmatpush.bf16.msra.mxu0 0
      %667 = vmatpush.bf16.msra.mxu0 0
      %668 = vmatpush.bf16.msra.mxu0 0
      %669 = vmatpush.bf16.msra.mxu0 0
      %670 = vmatpush.bf16.msra.mxu0 %v655
      %671 = vmatmul.bf16.gmra.mxu0 %v652
      %v672 = vpop.f32.mrf.mxu0
      %v673 = vadd.f32 0.0, %v672
      %v674 = vpop.f32.mrf.mxu0
      %675 = vdwg.mxu0
      %676 = vmatpush.bf16.msra.mxu0 0
      %677 = vmatpush.bf16.msra.mxu0 0
      %678 = vmatpush.bf16.msra.mxu0 0
      %679 = vmatpush.bf16.msra.mxu0 0
      %680 = vmatpush.bf16.msra.mxu0 0
      %681 = vmatpush.bf16.msra.mxu0 0
      %682 = vmatpush.bf16.msra.mxu0 0
      %683 = vmatpush.bf16.msra.mxu0 %v658
      %684 = vmatmul.bf16.gmra.mxu0 %v652
      %v685 = vpop.f32.mrf.mxu0
      %v686 = vadd.f32 0.0, %v685
      %v687 = vpop.f32.mrf.mxu0
      %688 = vdwg.mxu0
      %689 = vmatpush.bf16.msra.mxu0 0
      %690 = vmatpush.bf16.msra.mxu0 0
      %691 = vmatpush.bf16.msra.mxu0 0
      %692 = vmatpush.bf16.msra.mxu0 0
      %693 = vmatpush.bf16.msra.mxu0 0
      %694 = vmatpush.bf16.msra.mxu0 0
      %695 = vmatpush.bf16.msra.mxu0 0
      %696 = vmatpush.bf16.msra.mxu0 %v661
      %697 = vmatmul.bf16.gmra.mxu0 %v652
      %v698 = vpop.f32.mrf.mxu0
      %v699 = vadd.f32 0.0, %v698
      %v700 = vpop.f32.mrf.mxu0
      %701 = vdwg.mxu0
      %v702 = vadd.f32 %v628, %v673
      %v703 = vadd.f32 %v629, %v686
      %v704 = vadd.f32 %v630, %v699
      %v705 = vld [vmem:[%s268] sm:$0x3f]
      %s706 = scalar_lea.vmem %s256, 24
      %v707 = vld [vmem:[%s706] sm:$0xf]
      %709 = vst [vmem:[#allocation1] ss:$4 sm:$0xff] %v705
      %v710 = vld.sshfl [vmem:[#allocation1] sm:$0xff pattern:$0x73625140]
      %v712 = vld.sshfl [vmem:[#allocation1 + $0x8] sm:$0xff pattern:$0x73625140]
      %v714 = vld.sshfl [vmem:[#allocation1 + $0x10] sm:$0xff pattern:$0x73625140]
      %716 = vrot.lane.b32.xlu0 %v710, 92
      %v717 = vpop.permute.xlu0 %716
      %718 = vrot.lane.b32.xlu0 %v712, 92
      %v719 = vpop.permute.xlu0 %718
      %720 = vrot.lane.b32.xlu0 %v714, 92
      %v721 = vpop.permute.xlu0 %720
      %vm722 = vcmask 752640
      %v723 = vsel %vm722, %v717, %v719
      %v724 = vsel %vm722, %v719, %v721
      %v726 = vsel %vm304, %v707, 0
      %v729 = vsel %vm308, %v723, 0
      %v732 = vsel %vm308, %v724, 0
      %v735 = vsel %vm308, %v721, 0
      %737 = vmatpush.bf16.msra.mxu0 0
      %738 = vmatpush.bf16.msra.mxu0 0
      %739 = vmatpush.bf16.msra.mxu0 0
      %740 = vmatpush.bf16.msra.mxu0 0
      %741 = vmatpush.bf16.msra.mxu0 0
      %742 = vmatpush.bf16.msra.mxu0 0
      %743 = vmatpush.bf16.msra.mxu0 0
      %744 = vmatpush.bf16.msra.mxu0 %v729
      %745 = vmatmul.bf16.gmra.mxu0 %v726
      %v746 = vpop.f32.mrf.mxu0
      %v747 = vadd.f32 0.0, %v746
      %v748 = vpop.f32.mrf.mxu0
      %749 = vdwg.mxu0
      %750 = vmatpush.bf16.msra.mxu0 0
      %751 = vmatpush.bf16.msra.mxu0 0
      %752 = vmatpush.bf16.msra.mxu0 0
      %753 = vmatpush.bf16.msra.mxu0 0
      %754 = vmatpush.bf16.msra.mxu0 0
      %755 = vmatpush.bf16.msra.mxu0 0
      %756 = vmatpush.bf16.msra.mxu0 0
      %757 = vmatpush.bf16.msra.mxu0 %v732
      %758 = vmatmul.bf16.gmra.mxu0 %v726
      %v759 = vpop.f32.mrf.mxu0
      %v760 = vadd.f32 0.0, %v759
      %v761 = vpop.f32.mrf.mxu0
      %762 = vdwg.mxu0
      %763 = vmatpush.bf16.msra.mxu0 0
      %764 = vmatpush.bf16.msra.mxu0 0
      %765 = vmatpush.bf16.msra.mxu0 0
      %766 = vmatpush.bf16.msra.mxu0 0
      %767 = vmatpush.bf16.msra.mxu0 0
      %768 = vmatpush.bf16.msra.mxu0 0
      %769 = vmatpush.bf16.msra.mxu0 0
      %770 = vmatpush.bf16.msra.mxu0 %v735
      %771 = vmatmul.bf16.gmra.mxu0 %v726
      %v772 = vpop.f32.mrf.mxu0
      %v773 = vadd.f32 0.0, %v772
      %v774 = vpop.f32.mrf.mxu0
      %775 = vdwg.mxu0
      %v776 = vadd.f32 %v702, %v747
      %v777 = vadd.f32 %v703, %v760
      %v778 = vadd.f32 %v704, %v773
      %v779 = vld [vmem:[%s268] sm:$0x3f]
      %s780 = scalar_lea.vmem %s256, 28
      %v781 = vld [vmem:[%s780] sm:$0xf]
      %783 = vst [vmem:[#allocation1] ss:$4 sm:$0xff] %v779
      %v784 = vld.sshfl [vmem:[#allocation1] sm:$0xff pattern:$0x73625140]
      %v786 = vld.sshfl [vmem:[#allocation1 + $0x8] sm:$0xff pattern:$0x73625140]
      %v788 = vld.sshfl [vmem:[#allocation1 + $0x10] sm:$0xff pattern:$0x73625140]
      %790 = vrot.lane.b32.xlu0 %v784, 91
      %v791 = vpop.permute.xlu0 %790
      %792 = vrot.lane.b32.xlu0 %v786, 91
      %v793 = vpop.permute.xlu0 %792
      %794 = vrot.lane.b32.xlu0 %v788, 91
      %v795 = vpop.permute.xlu0 %794
      %vm796 = vcmask 744448
      %v797 = vsel %vm796, %v791, %v793
      %v798 = vsel %vm796, %v793, %v795
      %v800 = vsel %vm304, %v781, 0
      %v803 = vsel %vm308, %v797, 0
      %v806 = vsel %vm308, %v798, 0
      %v809 = vsel %vm308, %v795, 0
      %811 = vmatpush.bf16.msra.mxu0 0
      %812 = vmatpush.bf16.msra.mxu0 0
      %813 = vmatpush.bf16.msra.mxu0 0
      %814 = vmatpush.bf16.msra.mxu0 0
      %815 = vmatpush.bf16.msra.mxu0 0
      %816 = vmatpush.bf16.msra.mxu0 0
      %817 = vmatpush.bf16.msra.mxu0 0
      %818 = vmatpush.bf16.msra.mxu0 %v803
      %819 = vmatmul.bf16.gmra.mxu0 %v800
      %v820 = vpop.f32.mrf.mxu0
      %v821 = vadd.f32 0.0, %v820
      %v822 = vpop.f32.mrf.mxu0
      %823 = vdwg.mxu0
      %824 = vmatpush.bf16.msra.mxu0 0
      %825 = vmatpush.bf16.msra.mxu0 0
      %826 = vmatpush.bf16.msra.mxu0 0
      %827 = vmatpush.bf16.msra.mxu0 0
      %828 = vmatpush.bf16.msra.mxu0 0
      %829 = vmatpush.bf16.msra.mxu0 0
      %830 = vmatpush.bf16.msra.mxu0 0
      %831 = vmatpush.bf16.msra.mxu0 %v806
      %832 = vmatmul.bf16.gmra.mxu0 %v800
      %v833 = vpop.f32.mrf.mxu0
      %v834 = vadd.f32 0.0, %v833
      %v835 = vpop.f32.mrf.mxu0
      %836 = vdwg.mxu0
      %837 = vmatpush.bf16.msra.mxu0 0
      %838 = vmatpush.bf16.msra.mxu0 0
      %839 = vmatpush.bf16.msra.mxu0 0
      %840 = vmatpush.bf16.msra.mxu0 0
      %841 = vmatpush.bf16.msra.mxu0 0
      %842 = vmatpush.bf16.msra.mxu0 0
      %843 = vmatpush.bf16.msra.mxu0 0
      %844 = vmatpush.bf16.msra.mxu0 %v809
      %845 = vmatmul.bf16.gmra.mxu0 %v800
      %v846 = vpop.f32.mrf.mxu0
      %v847 = vadd.f32 0.0, %v846
      %v848 = vpop.f32.mrf.mxu0
      %849 = vdwg.mxu0
      %v850 = vadd.f32 %v776, %v821
      %v851 = vadd.f32 %v777, %v834
      %v852 = vadd.f32 %v778, %v847
      %v853 = vld [vmem:[%s268] sm:$0x3f]
      %s854 = scalar_lea.vmem %s256, 32
      %v855 = vld [vmem:[%s854] sm:$0xf]
      %857 = vst [vmem:[#allocation1] ss:$4 sm:$0xff] %v853
      %v858 = vld.sshfl [vmem:[#allocation1] sm:$0xff pattern:$0x73625140]
      %v860 = vld.sshfl [vmem:[#allocation1 + $0x8] sm:$0xff pattern:$0x73625140]
      %v862 = vld.sshfl [vmem:[#allocation1 + $0x10] sm:$0xff pattern:$0x73625140]
      %864 = vrot.lane.b32.xlu0 %v858, 90
      %v865 = vpop.permute.xlu0 %864
      %866 = vrot.lane.b32.xlu0 %v860, 90
      %v867 = vpop.permute.xlu0 %866
      %868 = vrot.lane.b32.xlu0 %v862, 90
      %v869 = vpop.permute.xlu0 %868
      %vm870 = vcmask 736256
      %v871 = vsel %vm870, %v865, %v867
      %v872 = vsel %vm870, %v867, %v869
      %v874 = vsel %vm304, %v855, 0
      %v877 = vsel %vm308, %v871, 0
      %v880 = vsel %vm308, %v872, 0
      %v883 = vsel %vm308, %v869, 0
      %885 = vmatpush.bf16.msra.mxu0 0
      %886 = vmatpush.bf16.msra.mxu0 0
      %887 = vmatpush.bf16.msra.mxu0 0
      %888 = vmatpush.bf16.msra.mxu0 0
      %889 = vmatpush.bf16.msra.mxu0 0
      %890 = vmatpush.bf16.msra.mxu0 0
      %891 = vmatpush.bf16.msra.mxu0 0
      %892 = vmatpush.bf16.msra.mxu0 %v877
      %893 = vmatmul.bf16.gmra.mxu0 %v874
      %v894 = vpop.f32.mrf.mxu0
      %v895 = vadd.f32 0.0, %v894
      %v896 = vpop.f32.mrf.mxu0
      %897 = vdwg.mxu0
      %898 = vmatpush.bf16.msra.mxu0 0
      %899 = vmatpush.bf16.msra.mxu0 0
      %900 = vmatpush.bf16.msra.mxu0 0
      %901 = vmatpush.bf16.msra.mxu0 0
      %902 = vmatpush.bf16.msra.mxu0 0
      %903 = vmatpush.bf16.msra.mxu0 0
      %904 = vmatpush.bf16.msra.mxu0 0
      %905 = vmatpush.bf16.msra.mxu0 %v880
      %906 = vmatmul.bf16.gmra.mxu0 %v874
      %v907 = vpop.f32.mrf.mxu0
      %v908 = vadd.f32 0.0, %v907
      %v909 = vpop.f32.mrf.mxu0
      %910 = vdwg.mxu0
      %911 = vmatpush.bf16.msra.mxu0 0
      %912 = vmatpush.bf16.msra.mxu0 0
      %913 = vmatpush.bf16.msra.mxu0 0
      %914 = vmatpush.bf16.msra.mxu0 0
      %915 = vmatpush.bf16.msra.mxu0 0
      %916 = vmatpush.bf16.msra.mxu0 0
      %917 = vmatpush.bf16.msra.mxu0 0
      %918 = vmatpush.bf16.msra.mxu0 %v883
      %919 = vmatmul.bf16.gmra.mxu0 %v874
      %v920 = vpop.f32.mrf.mxu0
      %v921 = vadd.f32 0.0, %v920
      %v922 = vpop.f32.mrf.mxu0
      %923 = vdwg.mxu0
      %v924 = vadd.f32 %v850, %v895
      %v925 = vadd.f32 %v851, %v908
      %v926 = vadd.f32 %v852, %v921
      %v927 = vld [vmem:[%s263] sm:$0xff]
      %929 = vset.pattern.permute.xlu0 0
      %930 = vperm.xlu0 %929, %v927
      %v931 = vpop.permute.xlu0 %930
      %v933 = vmul.f32 %v924, %v931
      %v934 = vmul.f32 %v925, %v931
      %v935 = vmul.f32 %v926, %v931
      %v936 = vld [vmem:[%s272] sm:$0x7]
      %v938 = vperm.slane %v936, 0
      %v939 = vperm.slane %v936, 1
      %v940 = vperm.slane %v936, 2
      %v944 = vadd.f32 %v933, %v938
      %v945 = vadd.f32 %v934, %v939
      %v946 = vadd.f32 %v935, %v940
      %v947 = vmul.f32 %v944, 0.2
      %v948 = vmul.f32 %v945, 0.2
      %v949 = vmul.f32 %v946, 0.2
      %v950 = vmax.f32 %v944, %v947
      %v951 = vmax.f32 %v945, %v948
      %v952 = vmax.f32 %v946, %v949
      %v953 = vpack.c.bf16 %v951, %v950
      %v954 = vpack.c.bf16 %v952, %v952
      %955 = vst [vmem:[%s281] sm:$0xff] %v953
      %vm956 = vcmask 257024
      %957 = vst.msk [vmem:[%s281 + $0x8] sm:$0xf] %vm956, %v954
      %p958 = scmp.lt.s32.totalorder %s20, 1
      %s959 = scalar_select %p958, %s20, 1
      %p960 = scmp.lt.s32.totalorder %s19, 0
      %s961 = scalar_select %p960, %s19, 0
      %s962 = smul.addr %s961, 3
      %s963 = smul.addr %s959, 3
      %s964 = sadd.s32 %s962, %s963
      %s965 = smul.addr %s964, 4
      %s966 = scalar_lea.vmem %s4, %s965
      // Predicated region
      $region37: #{styled_conv_forward.1} parent=35 // pred_check
        %p967 = pneg %p153
      $region38: #{styled_conv_forward.1} parent=35 // pred_check_branch
        %969 = sbr.rel (%p967) target = $region40
      $region39: #{styled_conv_forward.1} parent=35 // pred_region
        _
      $region40: #{styled_conv_forward.1} parent=35 // pred_fallthru
        _
    $region36: #{styled_conv_forward.1} parent=5 // pred_fallthru
      _
    %p970 = scmp.le.s32.totalorder 2, %s10
    // Predicated region
    $region41: #{styled_conv_forward.1} parent=5 // pred_check
      %p971 = pneg %p970
    $region42: #{styled_conv_forward.1} parent=5 // pred_check_branch
      %973 = sbr.rel (%p971) target = $region44
    $region43: #{styled_conv_forward.1} parent=5 // pred_region
      %s974 = ssub.s32 %s10, 2
      // Predicated region
      $region45: #{styled_conv_forward.1} parent=43 // pred_check
        %p975 = pneg %p159
      $region46: #{styled_conv_forward.1} parent=43 // pred_check_branch
        %977 = sbr.rel (%p975) target = $region48
      $region47: #{styled_conv_forward.1} parent=43 // pred_region
        %p978 = scmp.lt.s32.totalorder %s22, 1
        %s979 = scalar_select %p978, %s22, 1
        %p980 = scmp.lt.s32.totalorder %s21, 0
        %s981 = scalar_select %p980, %s21, 0
        %s982 = smul.addr %s981, 3
        %s983 = smul.addr %s979, 3
        %s984 = sadd.s32 %s982, %s983
        %s985 = smul.addr %s984, 4
        %s986 = scalar_lea.vmem %s4, %s985
      $region48: #{styled_conv_forward.1} parent=43 // pred_fallthru
        _
    $region44: #{styled_conv_forward.1} parent=5 // pred_fallthru
      _
  $region6: #{styled_conv_forward.1} parent=0 // loop_footer
    %s14 = sadd.s32 1, %s10
  $region7: #{styled_conv_forward.1} parent=0 // loop_footer_branch
    %9 = sbr.rel target = $region3
  $region8: #{styled_conv_forward.1} parent=0 // loop_exit
    _

</llo_original>
